<compile_context>
chip_gen: v6e
topology: v6e:2x2x1
jax: 0.10.0
libtpu: 0.0.40
codegen_flags: <defaults>
</compile_context>

<pallas_src>
import math
import jax
import jax.numpy as jnp
from jax.experimental import pallas as pl
from jax.experimental.pallas import tpu as pltpu

LANE_W = 512            # lane-dense slab width (multiple of 128)
SUBLANES = 8            # f32 sublane granularity
MAX_BLOCK_ROWS = 1024   # (1024, 512) f32 block = 2 MiB per operand per buffer
VMEM_LIMIT = 40 * 1024 * 1024


def _round_up(a: int, b: int) -> int:
    return -(-a // b) * b


def _pick_layout(n_elem: int):
    """Pick (rows, block_rows) for the (rows, LANE_W) slab.

    Guarantees rows % block_rows == 0 (grid divides exactly, no masking) and
    block_rows is a multiple of 8.
    """
    rows_needed = -(-n_elem // LANE_W)
    if rows_needed <= MAX_BLOCK_ROWS:
        block_rows = max(SUBLANES, _round_up(rows_needed, SUBLANES))
        rows = block_rows
    else:
        block_rows = MAX_BLOCK_ROWS
        rows = _round_up(rows_needed, block_rows)
    return rows, block_rows


def _to_slab(x, n_elem: int, rows: int):
    """Flatten to 1D and reshape to (rows, LANE_W); pad only when required."""
    flat = x.reshape(-1)
    pad = rows * LANE_W - n_elem
    if pad:
        flat = jnp.pad(flat, (0, pad))       # single fused pad op; skipped when aligned
    return flat.reshape(rows, LANE_W)


# ----------------------------- kernels ---------------------------------------

def _mselc_sum_kernel(lam_ref, n_ref, b_ref, t_ref, out_ref):
    """Accumulates per-chunk partial sums into a resident (1, 8, LANE_W) block.

    Grid = (outer_parallel_chunks, inner_reduction_steps). The output block
    index depends only on the outer axis, so it stays resident in VMEM across
    the inner axis (accumulator pattern); zero padding contributes exactly 0.
    """
    i = pl.program_id(1)

    @pl.when(i == 0)
    def _():
        out_ref[...] = jnp.zeros_like(out_ref)

    lam = lam_ref[0, 0]
    dn = n_ref[...] - t_ref[...]
    db = n_ref[...] - b_ref[...]
    val = dn * dn + lam * (db * db)
    # Fold the (block_rows, LANE_W) block onto the vreg-shaped accumulator:
    # pure VPU elementwise adds; the expensive cross-lane reduce happens once,
    # outside the kernel, on a few KiB.
    out_ref[...] += jnp.sum(val.reshape(-1, SUBLANES, LANE_W), axis=0)[None]


def _mselc_none_kernel(lam_ref, n_ref, b_ref, t_ref, out_ref):
    """Elementwise (unreduced) loss."""
    lam = lam_ref[0, 0]
    dn = n_ref[...] - t_ref[...]
    db = n_ref[...] - b_ref[...]
    out_ref[...] = (dn * dn + lam * (db * db)).astype(out_ref.dtype)


# ----------------------------- wrapper ----------------------------------------

def mselc_loss(input_n, input_b, target, logits_calibration_degree,
               reduction: str = "mean"):
    if reduction not in ("none", "mean", "sum"):
        raise ValueError(f"{reduction} is not a valid value for reduction")

    shape = jnp.broadcast_shapes(jnp.shape(input_n), jnp.shape(input_b),
                                 jnp.shape(target))
    out_dtype = jnp.result_type(input_n, input_b, target)
    if not jnp.issubdtype(out_dtype, jnp.floating):
        out_dtype = jnp.float32

    n_elem = int(math.prod(shape))
    lam = jnp.asarray(logits_calibration_degree, jnp.float32).reshape(1, 1)

    if n_elem == 0:  # match torch edge semantics without launching a kernel
        if reduction == "none":
            return jnp.zeros(shape, out_dtype)
        if reduction == "sum":
            return jnp.zeros((), out_dtype)
        return jnp.full((), jnp.nan, out_dtype)   # mean over empty -> NaN

    # TODO(synk): bf16 inputs are upcast to f32 here for simplicity; keeping
    # them bf16 in HBM would halve read traffic on v6e/v7x.
    xn = jnp.broadcast_to(input_n, shape).astype(jnp.float32)
    xb = jnp.broadcast_to(input_b, shape).astype(jnp.float32)
    xt = jnp.broadcast_to(target, shape).astype(jnp.float32)

    rows, block_rows = _pick_layout(n_elem)
    n2 = _to_slab(xn, n_elem, rows)
    b2 = _to_slab(xb, n_elem, rows)
    t2 = _to_slab(xt, n_elem, rows)

    num_blocks = rows // block_rows
    lam_spec = pl.BlockSpec(memory_space=pltpu.MemorySpace.SMEM)

    if reduction in ("mean", "sum"):
        # Small 'parallel' outer axis so both TensorCores participate on v7x;
        # inner 'arbitrary' axis is the accumulation loop.
        outer = 2 if (num_blocks >= 2 and num_blocks % 2 == 0) else 1
        inner = num_blocks // outer
        data_spec = pl.BlockSpec((block_rows, LANE_W),
                                 lambda c, i: (c * inner + i, 0))
        out = pl.pallas_call(
            _mselc_sum_kernel,
            out_shape=jax.ShapeDtypeStruct((outer, SUBLANES, LANE_W),
                                           jnp.float32),
            grid=(outer, inner),
            in_specs=[lam_spec, data_spec, data_spec, data_spec],
            out_specs=pl.BlockSpec((1, SUBLANES, LANE_W),
                                   lambda c, i: (c, 0, 0)),
            compiler_params=pltpu.CompilerParams(
                dimension_semantics=("parallel", "arbitrary"),
                vmem_limit_bytes=VMEM_LIMIT),
        )(lam, n2, b2, t2)
        total = jnp.sum(out)                     # tiny final cross-lane reduce
        if reduction == "mean":
            total = total / jnp.float32(n_elem)
        return total.astype(out_dtype)

    # reduction == 'none'
    data_spec = pl.BlockSpec((block_rows, LANE_W), lambda i: (i, 0))
    out = pl.pallas_call(
        _mselc_none_kernel,
        out_shape=jax.ShapeDtypeStruct((rows, LANE_W), out_dtype),
        grid=(num_blocks,),
        in_specs=[lam_spec, data_spec, data_spec, data_spec],
        out_specs=data_spec,
        compiler_params=pltpu.CompilerParams(
            dimension_semantics=("parallel",),
            vmem_limit_bytes=VMEM_LIMIT),
    )(lam, n2, b2, t2)
    if rows * LANE_W == n_elem:
        return out.reshape(shape)
    return out.reshape(-1)[:n_elem].reshape(shape)


class MSELCLoss:
    """JAX/Pallas port of the PyTorch MSELCLoss module (forward only)."""

    def __init__(self, size_average=None, reduce=None, reduction: str = "mean"):
        # Legacy size_average/reduce handling (mirrors torch semantics).
        if size_average is not None or reduce is not None:
            size_average = True if size_average is None else size_average
            reduce = True if reduce is None else reduce
            if not reduce:
                reduction = "none"
            elif size_average:
                reduction = "mean"
            else:
                reduction = "sum"
        self.reduction = reduction

    def __call__(self, input_n, input_b, target, logits_calibration_degree):
        return mselc_loss(input_n, input_b, target, logits_calibration_degree,
                          reduction=self.reduction)


# ----------------------------- demo / check -----------------------------------

if __name__ == "__main__":
    key = jax.random.PRNGKey(0)
    k1, k2, k3 = jax.random.split(key, 3)

    # Small shapes consistent with the (N, *) contract.
    shape = (2, 4, 16, 16)
    input_n = jax.random.normal(k1, shape, dtype=jnp.float32)
    input_b = jax.random.normal(k2, shape, dtype=jnp.float32)
    target = jax.random.normal(k3, shape, dtype=jnp.float32)
    lam = 0.7  # logits_calibraion_degree

    loss_mod = MSELCLoss()  # default reduction='mean'
    out = jax.block_until_ready(loss_mod(input_n, input_b, target, lam))
    ref = jnp.mean((input_n - target) ** 2 + lam * (input_n - input_b) ** 2)
    assert jnp.allclose(out, ref, rtol=1e-5, atol=1e-5), (out, ref)

    # 'sum' and 'none' paths.
    out_sum = jax.block_until_ready(
        MSELCLoss(reduction="sum")(input_n, input_b, target, lam))
    ref_sum = jnp.sum((input_n - target) ** 2 + lam * (input_n - input_b) ** 2)
    assert jnp.allclose(out_sum, ref_sum, rtol=1e-5, atol=1e-4)

    out_none = jax.block_until_ready(
        MSELCLoss(reduction="none")(input_n, input_b, target, lam))
    ref_none = (input_n - target) ** 2 + lam * (input_n - input_b) ** 2
    assert out_none.shape == shape
    assert jnp.allclose(out_none, ref_none, rtol=1e-5, atol=1e-5)

    # Medium aligned case: exercises multi-block grid + the 2-chunk
    # 'parallel' reduction axis (both TensorCores on v7x) with zero padding.
    shape2 = (8, 8, 128, 128)   # 1,048,576 elements -> 2 blocks of (1024, 512)
    a = jax.random.normal(k1, shape2, dtype=jnp.float32)
    b = jax.random.normal(k2, shape2, dtype=jnp.float32)
    t = jax.random.normal(k3, shape2, dtype=jnp.float32)
    out2 = jax.block_until_ready(MSELCLoss()(a, b, t, lam))
    ref2 = jnp.mean((a - t) ** 2 + lam * (a - b) ** 2)
    assert jnp.allclose(out2, ref2, rtol=1e-5, atol=1e-5), (out2, ref2)

    # Unaligned case: exercises the tail-padding fallback path.
    shape3 = (3, 5, 7, 11)      # 1155 elements, not a multiple of 512
    a3 = jax.random.normal(k1, shape3, dtype=jnp.float32)
    b3 = jax.random.normal(k2, shape3, dtype=jnp.float32)
    t3 = jax.random.normal(k3, shape3, dtype=jnp.float32)
    out3 = jax.block_until_ready(MSELCLoss(reduction="sum")(a3, b3, t3, lam))
    ref3 = jnp.sum((a3 - t3) ** 2 + lam * (a3 - b3) ** 2)
    assert jnp.allclose(out3, ref3, rtol=1e-5, atol=1e-4), (out3, ref3)

    print("KERNEL_OK")
</pallas_src>

<mosaic_0001>
module attributes {stable_mosaic.version = 11 : i64} {
  func.func @_mselc_sum_kernel(%arg0: i32, %arg1: i32, %arg2: memref<1x1xf32, #tpu.memory_space<smem>>, %arg3: memref<8x512xf32, #tpu.memory_space<vmem>>, %arg4: memref<8x512xf32, #tpu.memory_space<vmem>>, %arg5: memref<8x512xf32, #tpu.memory_space<vmem>>, %arg6: memref<1x8x512xf32, #tpu.memory_space<vmem>>) attributes {dimension_semantics = [#tpu.dimension_semantics<parallel>, #tpu.dimension_semantics<arbitrary>], iteration_bounds = array<i64: 1, 1>, scalar_prefetch = 0 : i64, scratch_operands = 0 : i64, tpu.core_type = #tpu.core_type<tc>, window_params = [{transform_indices = @transform_0, window_bounds = array<i64: 1, 1>}, {transform_indices = @transform_1, window_bounds = array<i64: 8, 512>}, {transform_indices = @transform_2, window_bounds = array<i64: 8, 512>}, {transform_indices = @transform_3, window_bounds = array<i64: 8, 512>}, {transform_indices = @transform_4, window_bounds = array<i64: 1, 8, 512>}]} {
    %c0_i32 = arith.constant 0 : i32
    %0 = arith.cmpi eq, %arg1, %c0_i32 : i32
    %1 = arith.extui %0 : i1 to i32
    %c0_i32_0 = arith.constant 0 : i32
    %2 = arith.cmpi ne, %1, %c0_i32_0 : i32
    scf.if %2 {
      %cst_16 = arith.constant 0.000000e+00 : f32
      %21 = vector.broadcast %cst_16 : f32 to vector<1x8x512xf32>
      %c0_17 = arith.constant 0 : index
      %c0_18 = arith.constant 0 : index
      %c0_19 = arith.constant 0 : index
      %22 = vector.load %arg6[%c0_17, %c0_18, %c0_19] : memref<1x8x512xf32, #tpu.memory_space<vmem>>, vector<1x8x512xf32>
      tpu.vector_store %arg6[%c0_17, %c0_18, %c0_19], %21 {strides = array<i32>} : memref<1x8x512xf32, #tpu.memory_space<vmem>>, vector<1x8x512xf32>,
    } else {
    }
    %c0 = arith.constant 0 : index
    %c0_1 = arith.constant 0 : index
    %3 = memref.load %arg2[%c0, %c0_1] : memref<1x1xf32, #tpu.memory_space<smem>>
    %c0_2 = arith.constant 0 : index
    %c0_3 = arith.constant 0 : index
    %4 = vector.load %arg3[%c0_2, %c0_3] : memref<8x512xf32, #tpu.memory_space<vmem>>, vector<8x512xf32>
    %c0_4 = arith.constant 0 : index
    %c0_5 = arith.constant 0 : index
    %5 = vector.load %arg5[%c0_4, %c0_5] : memref<8x512xf32, #tpu.memory_space<vmem>>, vector<8x512xf32>
    %6 = arith.subf %4, %5 : vector<8x512xf32>
    %c0_6 = arith.constant 0 : index
    %c0_7 = arith.constant 0 : index
    %7 = vector.load %arg3[%c0_6, %c0_7] : memref<8x512xf32, #tpu.memory_space<vmem>>, vector<8x512xf32>
    %c0_8 = arith.constant 0 : index
    %c0_9 = arith.constant 0 : index
    %8 = vector.load %arg4[%c0_8, %c0_9] : memref<8x512xf32, #tpu.memory_space<vmem>>, vector<8x512xf32>
    %9 = arith.subf %7, %8 : vector<8x512xf32>
    %10 = arith.mulf %6, %6 : vector<8x512xf32>
    %11 = arith.mulf %9, %9 : vector<8x512xf32>
    %12 = vector.broadcast %3 : f32 to vector<8x512xf32>
    %13 = arith.mulf %12, %11 : vector<8x512xf32>
    %14 = arith.addf %10, %13 : vector<8x512xf32>
    %c0_10 = arith.constant 0 : index
    %c0_11 = arith.constant 0 : index
    %c0_12 = arith.constant 0 : index
    %15 = vector.load %arg6[%c0_10, %c0_11, %c0_12] : memref<1x8x512xf32, #tpu.memory_space<vmem>>, vector<1x8x512xf32>
    %16 = vector.shape_cast %14 : vector<8x512xf32> to vector<1x8x512xf32>
    %cst = arith.constant dense<0.000000e+00> : vector<8x512xf32>
    %17 = vector.multi_reduction <add>, %16, %cst [0] : vector<1x8x512xf32> to vector<8x512xf32>
    %18 = vector.shape_cast %17 : vector<8x512xf32> to vector<1x8x512xf32>
    %19 = arith.addf %15, %18 : vector<1x8x512xf32>
    %c0_13 = arith.constant 0 : index
    %c0_14 = arith.constant 0 : index
    %c0_15 = arith.constant 0 : index
    %20 = vector.load %arg6[%c0_13, %c0_14, %c0_15] : memref<1x8x512xf32, #tpu.memory_space<vmem>>, vector<1x8x512xf32>
    tpu.vector_store %arg6[%c0_13, %c0_14, %c0_15], %19 {strides = array<i32>} : memref<1x8x512xf32, #tpu.memory_space<vmem>>, vector<1x8x512xf32>,
    return
  }
  func.func @transform_0(%arg0: i32, %arg1: i32) -> (i32, i32) {
    %c0_i32 = arith.constant 0 : i32
    %c0_i32_0 = arith.constant 0 : i32
    %c0_i32_1 = arith.constant 0 : i32
    return %c0_i32, %c0_i32_0 : i32, i32
  }
  func.func @transform_1(%arg0: i32, %arg1: i32) -> (i32, i32) {
    %c1_i32 = arith.constant 1 : i32
    %0 = arith.muli %arg0, %c1_i32 : i32
    %1 = arith.addi %0, %arg1 : i32
    %c0_i32 = arith.constant 0 : i32
    %c0_i32_0 = arith.constant 0 : i32
    return %1, %c0_i32 : i32, i32
  }
  func.func @transform_2(%arg0: i32, %arg1: i32) -> (i32, i32) {
    %c1_i32 = arith.constant 1 : i32
    %0 = arith.muli %arg0, %c1_i32 : i32
    %1 = arith.addi %0, %arg1 : i32
    %c0_i32 = arith.constant 0 : i32
    %c0_i32_0 = arith.constant 0 : i32
    return %1, %c0_i32 : i32, i32
  }
  func.func @transform_3(%arg0: i32, %arg1: i32) -> (i32, i32) {
    %c1_i32 = arith.constant 1 : i32
    %0 = arith.muli %arg0, %c1_i32 : i32
    %1 = arith.addi %0, %arg1 : i32
    %c0_i32 = arith.constant 0 : i32
    %c0_i32_0 = arith.constant 0 : i32
    return %1, %c0_i32 : i32, i32
  }
  func.func @transform_4(%arg0: i32, %arg1: i32) -> (i32, i32, i32) {
    %c0_i32 = arith.constant 0 : i32
    %c0_i32_0 = arith.constant 0 : i32
    %c0_i32_1 = arith.constant 0 : i32
    return %arg0, %c0_i32, %c0_i32_0 : i32, i32, i32
  }
}

</mosaic_0001>

<llo_original>
// kernel: tpu_custom_call.1
$region0: #{tpu_custom_call.1}
  #allocation0 [shape = 'u32[]', space=smem, size = 0x4, offset = 0x4, fixed_abs, tag = 'smem constant byte address 0x4 - core index']
  #allocation1 [shape = 'u32[144,128]{1,0:T(1,128)}', space=vmem, size = 0x12000, scoped, tag = 'internal scratch']
  #allocation2 [shape = 'f32[1,1]{1,0:T(1,128)S(6)}', space=smem, size = 0x200, scoped, tag = 'scoped memory for tpu_custom_call.1']
  %s0 = inlined_call_operand.<no memory space> [shape: f32[1,1], index: 0, kind: input, shape index: {}]
  %s1 = inlined_call_operand.hbm [shape: f32[8,512], index: 1, kind: input, shape index: {}]
  %s2 = inlined_call_operand.hbm [shape: f32[8,512], index: 2, kind: input, shape index: {}]
  %s3 = inlined_call_operand.hbm [shape: f32[8,512], index: 3, kind: input, shape index: {}]
  %s4 = inlined_call_operand.hbm [shape: f32[1,8,512], index: 4, kind: output, shape index: {}]
  %s5 = sld [smem:[#allocation0]]
  $region42: #{tpu_custom_call.1} parent=0
    _
  %s7 = ssub.s32 1, %s5
  %s8 = scalar_select 0, %s7, %s5
  %9 = sst [smem:[#allocation2]] %s0
  $region1: #{tpu_custom_call.1} parent=0
    #allocation3 [shape = 'u8[16384]{0}', space=vmem, size = 0x4000, scoped, tag = 'input window, operand 1, single buffered']
    #allocation4 [shape = 's32[1]{0}', space=sflag, size = 0x4, scoped, tag = 'scoped memory for tpu_custom_call.1']
    #allocation5 [shape = 's32[1]{0}', space=sflag, size = 0x4, scoped, tag = 'scoped memory for tpu_custom_call.1']
    #allocation6 [shape = 'u8[16384]{0}', space=vmem, size = 0x4000, scoped, tag = 'input window, operand 2, single buffered']
    #allocation7 [shape = 's32[1]{0}', space=sflag, size = 0x4, scoped, tag = 'scoped memory for tpu_custom_call.1']
    #allocation8 [shape = 'u8[16384]{0}', space=vmem, size = 0x4000, scoped, tag = 'input window, operand 3, single buffered']
    #allocation9 [shape = 'u8[16384]{0}', space=vmem, size = 0x4000, scoped, tag = 'output window, operand 0, single buffered']
    %10 = vsyncpa [#allocation4], 0
    %11 = vsyncpa [#allocation7], 0
    %12 = vsyncpa [#allocation5], 0
    // Predicated region
    $region2: #{tpu_custom_call.1} parent=1 // pred_check
      _
    $region3: #{tpu_custom_call.1} parent=1 // pred_check_branch
      %14 = sbr.rel (0) target = $region5
    $region4: #{tpu_custom_call.1} parent=1 // pred_region
      _
    $region5: #{tpu_custom_call.1} parent=1 // pred_fallthru
      _
    // Predicated region
    $region6: #{tpu_custom_call.1} parent=1 // pred_check
      _
    $region7: #{tpu_custom_call.1} parent=1 // pred_check_branch
      %16 = sbr.rel (0) target = $region9
    $region8: #{tpu_custom_call.1} parent=1 // pred_region
      %s17 = sadd.s32 0, 0
      %s19 = ssub.s32 512, 512
      %20 = vsyncadd [#allocation4], %s19
      %s21 = smul.addr %s17, 4
      %s22 = smul.addr %s21, 128
      %s23 = scalar_lea.hbm %s1, %s22
      %s25 = sshll.u32 [#allocation3], 4
      %s26 = int_to_ptr.vmem [resolvable:$true] %s25
      %28 = dma.hbm_to_vmem [thread:$0]  %s23, 512, %s26, [#allocation4]
    $region9: #{tpu_custom_call.1} parent=1 // pred_fallthru
      _
    // Predicated region
    $region10: #{tpu_custom_call.1} parent=1 // pred_check
      _
    $region11: #{tpu_custom_call.1} parent=1 // pred_check_branch
      %30 = sbr.rel (0) target = $region13
    $region12: #{tpu_custom_call.1} parent=1 // pred_region
      %s31 = sadd.s32 0, 0
      %s33 = ssub.s32 512, 512
      %34 = vsyncadd [#allocation7], %s33
      %s35 = smul.addr %s31, 4
      %s36 = smul.addr %s35, 128
      %s37 = scalar_lea.hbm %s2, %s36
      %s39 = sshll.u32 [#allocation6], 4
      %s40 = int_to_ptr.vmem [resolvable:$true] %s39
      %42 = dma.hbm_to_vmem [thread:$0]  %s37, 512, %s40, [#allocation7]
    $region13: #{tpu_custom_call.1} parent=1 // pred_fallthru
      _
    // Predicated region
    $region14: #{tpu_custom_call.1} parent=1 // pred_check
      _
    $region15: #{tpu_custom_call.1} parent=1 // pred_check_branch
      %44 = sbr.rel (0) target = $region17
    $region16: #{tpu_custom_call.1} parent=1 // pred_region
      %s45 = sadd.s32 0, 0
      %s47 = ssub.s32 512, 512
      %48 = vsyncadd [#allocation7], %s47
      %s49 = smul.addr %s45, 4
      %s50 = smul.addr %s49, 128
      %s51 = scalar_lea.hbm %s3, %s50
      %s53 = sshll.u32 [#allocation8], 4
      %s54 = int_to_ptr.vmem [resolvable:$true] %s53
      %56 = dma.hbm_to_vmem [thread:$0]  %s51, 512, %s54, [#allocation7]
    $region17: #{tpu_custom_call.1} parent=1 // pred_fallthru
      _
    // Predicated region
    $region18: #{tpu_custom_call.1} parent=1 // pred_check
      _
    $region19: #{tpu_custom_call.1} parent=1 // pred_check_branch
      %58 = sbr.rel (0) target = $region21
    $region20: #{tpu_custom_call.1} parent=1 // pred_region
      %59 = dma.done [#allocation4], 512
    $region21: #{tpu_custom_call.1} parent=1 // pred_fallthru
      _
    // Predicated region
    $region22: #{tpu_custom_call.1} parent=1 // pred_check
      _
    $region23: #{tpu_custom_call.1} parent=1 // pred_check_branch
      %61 = sbr.rel (0) target = $region25
    $region24: #{tpu_custom_call.1} parent=1 // pred_region
      %62 = dma.done [#allocation7], 512
    $region25: #{tpu_custom_call.1} parent=1 // pred_fallthru
      _
    // Predicated region
    $region26: #{tpu_custom_call.1} parent=1 // pred_check
      _
    $region27: #{tpu_custom_call.1} parent=1 // pred_check_branch
      %64 = sbr.rel (0) target = $region29
    $region28: #{tpu_custom_call.1} parent=1 // pred_region
      %65 = dma.done [#allocation7], 512
    $region29: #{tpu_custom_call.1} parent=1 // pred_fallthru
      _
    %s66 = sadd.s32 0, 0
    %s67 = sadd.s32 0, 0
    %s68 = sadd.s32 0, 0
    %p69 = scmp.eq.s32.totalorder 0, 0
    // Predicated region
    $region30: #{tpu_custom_call.1} parent=1 // pred_check
      %p70 = pneg %p69
    $region31: #{tpu_custom_call.1} parent=1 // pred_check_branch
      %72 = sbr.rel (%p70) target = $region33
    $region32: #{tpu_custom_call.1} parent=1 // pred_region
      %73 = vst [vmem:[#allocation9] sm:$0xff] 0.0
      %74 = vst [vmem:[#allocation9 + $0x8] sm:$0xff] 0.0
      %75 = vst [vmem:[#allocation9 + $0x10] sm:$0xff] 0.0
      %76 = vst [vmem:[#allocation9 + $0x18] sm:$0xff] 0.0
    $region33: #{tpu_custom_call.1} parent=1 // pred_fallthru
      _
    %s77 = sld [smem:[#allocation2]]
    %v78 = vld [vmem:[#allocation3] sm:$0xff]
    %v79 = vld [vmem:[#allocation3 + $0x8] sm:$0xff]
    %v80 = vld [vmem:[#allocation3 + $0x10] sm:$0xff]
    %v81 = vld [vmem:[#allocation3 + $0x18] sm:$0xff]
    %v82 = vld [vmem:[#allocation8] sm:$0xff]
    %v83 = vld [vmem:[#allocation8 + $0x8] sm:$0xff]
    %v84 = vld [vmem:[#allocation8 + $0x10] sm:$0xff]
    %v85 = vld [vmem:[#allocation8 + $0x18] sm:$0xff]
    %v86 = vsub.f32 %v78, %v82
    %v87 = vsub.f32 %v79, %v83
    %v88 = vsub.f32 %v80, %v84
    %v89 = vsub.f32 %v81, %v85
    %v90 = vld [vmem:[#allocation6] sm:$0xff]
    %v91 = vld [vmem:[#allocation6 + $0x8] sm:$0xff]
    %v92 = vld [vmem:[#allocation6 + $0x10] sm:$0xff]
    %v93 = vld [vmem:[#allocation6 + $0x18] sm:$0xff]
    %v94 = vsub.f32 %v78, %v90
    %v95 = vsub.f32 %v79, %v91
    %v96 = vsub.f32 %v80, %v92
    %v97 = vsub.f32 %v81, %v93
    %v98 = vmul.f32 %v86, %v86
    %v99 = vmul.f32 %v87, %v87
    %v100 = vmul.f32 %v88, %v88
    %v101 = vmul.f32 %v89, %v89
    %v102 = vmul.f32 %v94, %v94
    %v103 = vmul.f32 %v95, %v95
    %v104 = vmul.f32 %v96, %v96
    %v105 = vmul.f32 %v97, %v97
    %v106 = vstv %s77
    %v107 = vmul.f32 %v106, %v102
    %v108 = vmul.f32 %v106, %v103
    %v109 = vmul.f32 %v106, %v104
    %v110 = vmul.f32 %v106, %v105
    %v111 = vadd.f32 %v98, %v107
    %v112 = vadd.f32 %v99, %v108
    %v113 = vadd.f32 %v100, %v109
    %v114 = vadd.f32 %v101, %v110
    %v115 = vld [vmem:[#allocation9] sm:$0xff]
    %v116 = vld [vmem:[#allocation9 + $0x8] sm:$0xff]
    %v117 = vld [vmem:[#allocation9 + $0x10] sm:$0xff]
    %v118 = vld [vmem:[#allocation9 + $0x18] sm:$0xff]
    %v119 = vadd.f32 %v111, 0.0
    %v120 = vadd.f32 %v112, 0.0
    %v121 = vadd.f32 %v113, 0.0
    %v122 = vadd.f32 %v114, 0.0
    %v123 = vadd.f32 %v115, %v119
    %v124 = vadd.f32 %v116, %v120
    %v125 = vadd.f32 %v117, %v121
    %v126 = vadd.f32 %v118, %v122
    %127 = vst [vmem:[#allocation9] sm:$0xff] %v123
    %128 = vst [vmem:[#allocation9 + $0x8] sm:$0xff] %v124
    %129 = vst [vmem:[#allocation9 + $0x10] sm:$0xff] %v125
    %130 = vst [vmem:[#allocation9 + $0x18] sm:$0xff] %v126
    // Predicated region
    $region34: #{tpu_custom_call.1} parent=1 // pred_check
      _
    $region35: #{tpu_custom_call.1} parent=1 // pred_check_branch
      %132 = sbr.rel (0) target = $region37
    $region36: #{tpu_custom_call.1} parent=1 // pred_region
      %s134 = ssub.s32 512, 512
      %135 = vsyncadd [#allocation5], %s134
      %s137 = sshll.u32 [#allocation9], 4
      %s138 = int_to_ptr.vmem [resolvable:$true] %s137
      %140 = dma.vmem_to_hbm [thread:$0]  %s138, 512, %s4, [#allocation5]
    $region37: #{tpu_custom_call.1} parent=1 // pred_fallthru
      _
    // Predicated region
    $region38: #{tpu_custom_call.1} parent=1 // pred_check
      _
    $region39: #{tpu_custom_call.1} parent=1 // pred_check_branch
      %142 = sbr.rel (0) target = $region41
    $region40: #{tpu_custom_call.1} parent=1 // pred_region
      %143 = dma.done [#allocation5], 512
    $region41: #{tpu_custom_call.1} parent=1 // pred_fallthru
      _
    %144 = vsyncpa [#allocation4], 1
    %145 = vsyncpa [#allocation7], 1
    %146 = vsyncpa [#allocation5], 1

</llo_original>
